<compile_context>
chip_gen: v5e
topology: v5e:2x2
jax: 0.10.0
libtpu: 0.0.40
codegen_flags: <defaults>
</compile_context>

<pallas_src>
import functools

import jax
import jax.numpy as jnp
import numpy as np
from jax.experimental import pallas as pl
from jax.experimental.pallas import tpu as pltpu

LANE = 128  # TPU lane width; all feature/output dims are padded to this.


def denoising_mlp_kernel(x_ref, z_ref, t_ref, wcond_ref, wslab_ref, bslab_ref,
                         out_ref, *, width, num_blocks):
    """x_ref:  (B, LANE) f32, zero-padded past `width`
       z_ref/t_ref: (B, num_conds) f32
       wcond_ref:  (num_conds, 2*num_blocks*LANE) bf16
                   columns [i*LANE : i*LANE+LANE]            -> gamma_i weights
                   columns [(nb+i)*LANE : (nb+i)*LANE+LANE]  -> beta_i  weights
       wslab_ref:  (2*num_blocks+1, LANE, LANE) bf16  rows 2i=w1_i, 2i+1=w2_i,
                   last = final linear (all zero-padded to 128x128)
       bslab_ref:  (R, 2*num_blocks*LANE) f32
                   row 0 = fused cond bias (cond bias + learnable gamma/beta),
                   row 1+2i = b1_i, row 2+2i = b2_i, row 2*nb+1 = final bias
                   (each only using the first LANE columns)."""
    nb = num_blocks
    inv_w = 1.0 / float(width)

    x = x_ref[...]                                           # (B, LANE) f32
    # z = t + z (f32 add on VPU), bf16 only for the MXU operand.
    zsum = (z_ref[...] + t_ref[...]).astype(jnp.bfloat16)    # (B, nc)

    # One fused conditioning matmul for all blocks; bias folded into bslab row0.
    gb = (jnp.dot(zsum, wcond_ref[...], preferred_element_type=jnp.float32)
          + bslab_ref[0:1, :])                               # (B, 2*nb*LANE) f32

    for i in range(nb):  # static, fully unrolled (nb is small)
        gamma = gb[:, i * LANE:(i + 1) * LANE]               # lane-aligned slices
        beta = gb[:, (nb + i) * LANE:(nb + i + 1) * LANE]

        # --- AdaLN --- (pad lanes of x are zero, so sum/width gives true stats;
        # gamma/beta are zero in pad lanes, so `out` pad lanes stay zero.)
        sum_x = jnp.sum(x, axis=-1, keepdims=True)
        sum_x2 = jnp.sum(x * x, axis=-1, keepdims=True)      # independent reduces
        mean = sum_x * inv_w
        var = jnp.maximum(sum_x2 * inv_w - mean * mean, 0.0)
        std = jnp.sqrt(var)                                  # unbiased=False
        inv = pl.reciprocal(std + 1e-5, approx=True)         # EUP slot, eps on std
        out = gamma * ((x - mean) * inv) + beta

        # --- linear1 -> SiLU -> linear2 (bf16 MXU, f32 accumulate) ---
        w1 = wslab_ref[2 * i]                                # (LANE, LANE) bf16
        w2 = wslab_ref[2 * i + 1]
        b1 = bslab_ref[1 + 2 * i:2 + 2 * i, :LANE]           # (1, LANE) f32
        b2 = bslab_ref[2 + 2 * i:3 + 2 * i, :LANE]

        h = jnp.dot(out.astype(jnp.bfloat16), w1,
                    preferred_element_type=jnp.float32) + b1
        h = h * jax.nn.sigmoid(h)                            # SiLU in f32
        h = jnp.dot(h.astype(jnp.bfloat16), w2,
                    preferred_element_type=jnp.float32) + b2

        # --- residual (in_channels == width) ---
        x = h + x

    # --- final linear, (B, LANE) lane-dense full store ---
    wf = wslab_ref[2 * nb]                                   # (LANE, LANE) bf16
    bf = bslab_ref[2 * nb + 1:2 * nb + 2, :LANE]             # (1, LANE) f32
    y = jnp.dot(x.astype(jnp.bfloat16), wf,
                preferred_element_type=jnp.float32) + bf
    out_ref[...] = y.astype(out_ref.dtype)


def pack_params(params):
    """Pack natural per-module params into the kernel's fused slabs.

    Called ONCE at init time — not on the per-call path."""
    nb, nc, W = params["wg"].shape
    CW = 2 * nb * LANE

    def pad_lane(a, to=LANE):
        return jnp.pad(a, [(0, 0)] * (a.ndim - 1) + [(0, to - a.shape[-1])])

    def pad_mat(m):  # (r, c) -> (LANE, LANE), zero rows/cols
        return jnp.pad(m, ((0, LANE - m.shape[0]), (0, LANE - m.shape[1])))

    # Fused conditioning weight, 128-lane chunk per gamma_i / beta_i.
    wcond = jnp.concatenate(
        [pad_lane(params["wg"][i]) for i in range(nb)]
        + [pad_lane(params["wb"][i]) for i in range(nb)],
        axis=-1).astype(jnp.bfloat16)                        # (nc, CW)

    # Fused conditioning bias: torch computes cond_to_gamma(z) + gamma (additive),
    # so the learnable gamma/beta fold exactly into the linear bias.
    bcond = jnp.concatenate(
        [pad_lane(params["bg"][i] + params["gamma"][i]) for i in range(nb)]
        + [pad_lane(params["bb"][i] + params["beta"][i]) for i in range(nb)],
        axis=-1)                                             # (1, CW)

    # Weight slab: rows 2i=w1_i, 2i+1=w2_i, last = final linear, all 128x128.
    w_entries = []
    for i in range(nb):
        w_entries.append(pad_mat(params["w1"][i]))
        w_entries.append(pad_mat(params["w2"][i]))
    wf = params.get("wf")
    if wf is None:  # out_channels == width -> final_linear is Identity
        wf, bf = jnp.eye(W, dtype=jnp.float32), jnp.zeros((1, W), jnp.float32)
    else:
        bf = params["bf"]
    w_entries.append(pad_mat(wf))
    wslab = jnp.stack(w_entries).astype(jnp.bfloat16)        # (2nb+1, LANE, LANE)

    # Bias slab (f32): row 0 = bcond (full width), then b1/b2 per block, final bias.
    rows = [bcond]
    for i in range(nb):
        rows.append(pad_lane(params["b1"][i], CW))
        rows.append(pad_lane(params["b2"][i], CW))
    rows.append(pad_lane(bf, CW))
    bslab = jnp.concatenate(rows, axis=0)
    bslab = jnp.pad(bslab, ((0, (-bslab.shape[0]) % 8), (0, 0))).astype(jnp.float32)

    return wcond, wslab, bslab


def denoising_mlp(x, z, t, packed, *, width, num_blocks, out_channels):
    """Per-call path: pad x to lane width, one pallas_call, slice the output."""
    assert out_channels <= LANE and width <= LANE
    wcond, wslab, bslab = packed
    B = x.shape[0]
    x_pad = jnp.pad(x.astype(jnp.float32), ((0, 0), (0, LANE - width)))

    vmem = pl.BlockSpec(memory_space=pltpu.MemorySpace.VMEM)
    kern = functools.partial(denoising_mlp_kernel, width=width,
                             num_blocks=num_blocks)
    y = pl.pallas_call(
        kern,
        out_shape=jax.ShapeDtypeStruct((B, LANE), jnp.float32),
        in_specs=[vmem] * 6,
        out_specs=vmem,
    )(x_pad, z.astype(jnp.float32), t.astype(jnp.float32), wcond, wslab, bslab)
    return y[:, :out_channels]


def init_params(key, width, num_conds, out_channels, num_blocks):
    ks = jax.random.split(key, 6)
    scale = 0.02
    return {
        # AdaLN cond_to_gamma / cond_to_beta linears (stored as (in, out))
        "wg": scale * jax.random.normal(ks[0], (num_blocks, num_conds, width), jnp.float32),
        "bg": jnp.zeros((num_blocks, 1, width), jnp.float32),
        "wb": scale * jax.random.normal(ks[1], (num_blocks, num_conds, width), jnp.float32),
        "bb": jnp.zeros((num_blocks, 1, width), jnp.float32),
        # AdaLN affine parameters: gamma init ones, beta init zeros
        "gamma": jnp.ones((num_blocks, 1, width), jnp.float32),
        "beta": jnp.zeros((num_blocks, 1, width), jnp.float32),
        # ResidualBlock linear1 / linear2 (in == out == width, required by residual)
        "w1": scale * jax.random.normal(ks[2], (num_blocks, width, width), jnp.float32),
        "b1": scale * jax.random.normal(ks[3], (num_blocks, 1, width), jnp.float32),
        "w2": scale * jax.random.normal(ks[4], (num_blocks, width, width), jnp.float32),
        "b2": jnp.zeros((num_blocks, 1, width), jnp.float32),
        # final linear width -> out_channels (out_channels != width in the example)
        "wf": scale * jax.random.normal(ks[5], (width, out_channels), jnp.float32),
        "bf": jnp.zeros((1, out_channels), jnp.float32),
    }


def reference_forward(x, z, t, params):
    """Pure-JAX f32 reference matching the PyTorch module semantics."""
    zc = z + t
    nb = params["w1"].shape[0]
    x = x.astype(jnp.float32)
    for i in range(nb):
        gamma = zc @ params["wg"][i] + params["bg"][i] + params["gamma"][i]
        beta = zc @ params["wb"][i] + params["bb"][i] + params["beta"][i]
        mean = x.mean(-1, keepdims=True)
        std = jnp.sqrt(((x - mean) ** 2).mean(-1, keepdims=True))  # unbiased=False
        out = gamma * ((x - mean) / (std + 1e-5)) + beta
        h = out @ params["w1"][i] + params["b1"][i]
        h = h * jax.nn.sigmoid(h)
        h = h @ params["w2"][i] + params["b2"][i]
        x = h + x
    return x @ params["wf"] + params["bf"]


if __name__ == "__main__":
    # Small shapes consistent with the module (residual forces in_channels == width).
    B = 8
    width = 32          # in_channels == width
    num_conds = 8
    out_channels = 16   # != width -> real final_linear
    num_blocks = 3

    key = jax.random.PRNGKey(0)
    kx, kz, kt, kp = jax.random.split(key, 4)
    x = jax.random.normal(kx, (B, width), jnp.float32)
    z = jax.random.normal(kz, (B, num_conds), jnp.float32)
    t = jax.random.normal(kt, (B, num_conds), jnp.float32)

    params = init_params(kp, width, num_conds, out_channels, num_blocks)
    packed = pack_params(params)   # one-time packing, NOT on the per-call path

    fwd = jax.jit(functools.partial(denoising_mlp, width=width,
                                    num_blocks=num_blocks,
                                    out_channels=out_channels))
    out = fwd(x, z, t, packed)
    jax.block_until_ready(out)
    assert out.shape == (B, out_channels)

    # Loose tolerance: bf16 MXU operands + approximate EUP reciprocal.
    ref = reference_forward(x, z, t, params)
    np.testing.assert_allclose(np.asarray(out), np.asarray(ref),
                               rtol=5e-2, atol=1e-2)
    print("KERNEL_OK")
</pallas_src>

<mosaic_0001>
module attributes {stable_mosaic.version = 11 : i64} {
  func.func @denoising_mlp_kernel(%arg0: memref<8x128xf32, #tpu.memory_space<vmem>>, %arg1: memref<8x8xf32, #tpu.memory_space<vmem>>, %arg2: memref<8x8xf32, #tpu.memory_space<vmem>>, %arg3: memref<8x768xbf16, #tpu.memory_space<vmem>>, %arg4: memref<7x128x128xbf16, #tpu.memory_space<vmem>>, %arg5: memref<8x768xf32, #tpu.memory_space<vmem>>, %arg6: memref<8x128xf32, #tpu.memory_space<vmem>>) attributes {dimension_semantics = [], scalar_prefetch = 0 : i64, scratch_operands = 0 : i64, tpu.core_type = #tpu.core_type<tc>} {
    %c0 = arith.constant 0 : index
    %c0_0 = arith.constant 0 : index
    %0 = vector.load %arg0[%c0, %c0_0] : memref<8x128xf32, #tpu.memory_space<vmem>>, vector<8x128xf32>
    %c0_1 = arith.constant 0 : index
    %c0_2 = arith.constant 0 : index
    %1 = vector.load %arg1[%c0_1, %c0_2] : memref<8x8xf32, #tpu.memory_space<vmem>>, vector<8x8xf32>
    %c0_3 = arith.constant 0 : index
    %c0_4 = arith.constant 0 : index
    %2 = vector.load %arg2[%c0_3, %c0_4] : memref<8x8xf32, #tpu.memory_space<vmem>>, vector<8x8xf32>
    %3 = arith.addf %1, %2 : vector<8x8xf32>
    %4 = arith.truncf %3 : vector<8x8xf32> to vector<8x8xbf16>
    %c0_5 = arith.constant 0 : index
    %c0_6 = arith.constant 0 : index
    %5 = vector.load %arg3[%c0_5, %c0_6] : memref<8x768xbf16, #tpu.memory_space<vmem>>, vector<8x768xbf16>
    %cst = arith.constant dense<0.000000e+00> : vector<8x768xf32>
    %6 = tpu.matmul %4, %5, %cst {dimension_numbers = #tpu.dot_dimension_numbers<[1], [0], [0], [1], [0, 0, 1, 1], [], []>} : vector<8x8xbf16>, vector<8x768xbf16>, vector<8x768xf32> -> vector<8x768xf32>
    %c0_7 = arith.constant 0 : index
    %c0_8 = arith.constant 0 : index
    %7 = vector.load %arg5[%c0_7, %c0_8] : memref<8x768xf32, #tpu.memory_space<vmem>>, vector<1x768xf32>
    %8 = vector.broadcast %7 : vector<1x768xf32> to vector<8x768xf32>
    %9 = arith.addf %6, %8 : vector<8x768xf32>
    %10 = vector.extract_strided_slice %9 {offsets = [0, 0], sizes = [8, 128], strides = [1, 1]} : vector<8x768xf32> to vector<8x128xf32>
    %11 = vector.extract_strided_slice %9 {offsets = [0, 384], sizes = [8, 128], strides = [1, 1]} : vector<8x768xf32> to vector<8x128xf32>
    %cst_9 = arith.constant dense<0.000000e+00> : vector<8xf32>
    %12 = vector.multi_reduction <add>, %0, %cst_9 [1] : vector<8x128xf32> to vector<8xf32>
    %13 = vector.shape_cast %12 : vector<8xf32> to vector<8x1xf32>
    %14 = arith.mulf %0, %0 : vector<8x128xf32>
    %cst_10 = arith.constant dense<0.000000e+00> : vector<8xf32>
    %15 = vector.multi_reduction <add>, %14, %cst_10 [1] : vector<8x128xf32> to vector<8xf32>
    %16 = vector.shape_cast %15 : vector<8xf32> to vector<8x1xf32>
    %cst_11 = arith.constant 3.125000e-02 : f32
    %17 = vector.broadcast %cst_11 : f32 to vector<8x1xf32>
    %18 = arith.mulf %13, %17 : vector<8x1xf32>
    %cst_12 = arith.constant 3.125000e-02 : f32
    %19 = vector.broadcast %cst_12 : f32 to vector<8x1xf32>
    %20 = arith.mulf %16, %19 : vector<8x1xf32>
    %21 = arith.mulf %18, %18 : vector<8x1xf32>
    %22 = arith.subf %20, %21 : vector<8x1xf32>
    %cst_13 = arith.constant 0.000000e+00 : f32
    %23 = vector.broadcast %cst_13 : f32 to vector<8x1xf32>
    %24 = arith.maximumf %22, %23 : vector<8x1xf32>
    %25 = math.sqrt %24 : vector<8x1xf32>
    %cst_14 = arith.constant 9.99999974E-6 : f32
    %26 = vector.broadcast %cst_14 : f32 to vector<8x1xf32>
    %27 = arith.addf %25, %26 : vector<8x1xf32>
    %28 = tpu.reciprocal %27 {approx = true} : vector<8x1xf32> -> vector<8x1xf32>
    %29 = vector.broadcast %18 : vector<8x1xf32> to vector<8x128xf32>
    %30 = arith.subf %0, %29 : vector<8x128xf32>
    %31 = vector.broadcast %28 : vector<8x1xf32> to vector<8x128xf32>
    %32 = arith.mulf %30, %31 : vector<8x128xf32>
    %33 = arith.mulf %10, %32 : vector<8x128xf32>
    %34 = arith.addf %33, %11 : vector<8x128xf32>
    %c0_15 = arith.constant 0 : index
    %c0_16 = arith.constant 0 : index
    %c0_17 = arith.constant 0 : index
    %35 = vector.load %arg4[%c0_15, %c0_16, %c0_17] : memref<7x128x128xbf16, #tpu.memory_space<vmem>>, vector<1x128x128xbf16>
    %36 = vector.shape_cast %35 : vector<1x128x128xbf16> to vector<128x128xbf16>
    %c1 = arith.constant 1 : index
    %c0_18 = arith.constant 0 : index
    %c0_19 = arith.constant 0 : index
    %37 = vector.load %arg4[%c1, %c0_18, %c0_19] : memref<7x128x128xbf16, #tpu.memory_space<vmem>>, vector<1x128x128xbf16>
    %38 = vector.shape_cast %37 : vector<1x128x128xbf16> to vector<128x128xbf16>
    %c1_20 = arith.constant 1 : index
    %c0_21 = arith.constant 0 : index
    %39 = vector.load %arg5[%c1_20, %c0_21] : memref<8x768xf32, #tpu.memory_space<vmem>>, vector<1x128xf32>
    %c2 = arith.constant 2 : index
    %c0_22 = arith.constant 0 : index
    %40 = vector.load %arg5[%c2, %c0_22] : memref<8x768xf32, #tpu.memory_space<vmem>>, vector<1x128xf32>
    %41 = arith.truncf %34 : vector<8x128xf32> to vector<8x128xbf16>
    %cst_23 = arith.constant dense<0.000000e+00> : vector<8x128xf32>
    %42 = tpu.matmul %41, %36, %cst_23 {dimension_numbers = #tpu.dot_dimension_numbers<[1], [0], [0], [1], [0, 0, 1, 1], [], []>} : vector<8x128xbf16>, vector<128x128xbf16>, vector<8x128xf32> -> vector<8x128xf32>
    %43 = vector.broadcast %39 : vector<1x128xf32> to vector<8x128xf32>
    %44 = arith.addf %42, %43 : vector<8x128xf32>
    %45 = arith.negf %44 : vector<8x128xf32>
    %46 = math.exp %45 : vector<8x128xf32>
    %cst_24 = arith.constant 1.000000e+00 : f32
    %47 = vector.broadcast %cst_24 : f32 to vector<8x128xf32>
    %48 = arith.addf %47, %46 : vector<8x128xf32>
    %49 = arith.divf %47, %48 : vector<8x128xf32>
    %50 = arith.mulf %44, %49 : vector<8x128xf32>
    %51 = arith.truncf %50 : vector<8x128xf32> to vector<8x128xbf16>
    %cst_25 = arith.constant dense<0.000000e+00> : vector<8x128xf32>
    %52 = tpu.matmul %51, %38, %cst_25 {dimension_numbers = #tpu.dot_dimension_numbers<[1], [0], [0], [1], [0, 0, 1, 1], [], []>} : vector<8x128xbf16>, vector<128x128xbf16>, vector<8x128xf32> -> vector<8x128xf32>
    %53 = vector.broadcast %40 : vector<1x128xf32> to vector<8x128xf32>
    %54 = arith.addf %52, %53 : vector<8x128xf32>
    %55 = arith.addf %54, %0 : vector<8x128xf32>
    %56 = vector.extract_strided_slice %9 {offsets = [0, 128], sizes = [8, 128], strides = [1, 1]} : vector<8x768xf32> to vector<8x128xf32>
    %57 = vector.extract_strided_slice %9 {offsets = [0, 512], sizes = [8, 128], strides = [1, 1]} : vector<8x768xf32> to vector<8x128xf32>
    %cst_26 = arith.constant dense<0.000000e+00> : vector<8xf32>
    %58 = vector.multi_reduction <add>, %55, %cst_26 [1] : vector<8x128xf32> to vector<8xf32>
    %59 = vector.shape_cast %58 : vector<8xf32> to vector<8x1xf32>
    %60 = arith.mulf %55, %55 : vector<8x128xf32>
    %cst_27 = arith.constant dense<0.000000e+00> : vector<8xf32>
    %61 = vector.multi_reduction <add>, %60, %cst_27 [1] : vector<8x128xf32> to vector<8xf32>
    %62 = vector.shape_cast %61 : vector<8xf32> to vector<8x1xf32>
    %cst_28 = arith.constant 3.125000e-02 : f32
    %63 = vector.broadcast %cst_28 : f32 to vector<8x1xf32>
    %64 = arith.mulf %59, %63 : vector<8x1xf32>
    %cst_29 = arith.constant 3.125000e-02 : f32
    %65 = vector.broadcast %cst_29 : f32 to vector<8x1xf32>
    %66 = arith.mulf %62, %65 : vector<8x1xf32>
    %67 = arith.mulf %64, %64 : vector<8x1xf32>
    %68 = arith.subf %66, %67 : vector<8x1xf32>
    %cst_30 = arith.constant 0.000000e+00 : f32
    %69 = vector.broadcast %cst_30 : f32 to vector<8x1xf32>
    %70 = arith.maximumf %68, %69 : vector<8x1xf32>
    %71 = math.sqrt %70 : vector<8x1xf32>
    %cst_31 = arith.constant 9.99999974E-6 : f32
    %72 = vector.broadcast %cst_31 : f32 to vector<8x1xf32>
    %73 = arith.addf %71, %72 : vector<8x1xf32>
    %74 = tpu.reciprocal %73 {approx = true} : vector<8x1xf32> -> vector<8x1xf32>
    %75 = vector.broadcast %64 : vector<8x1xf32> to vector<8x128xf32>
    %76 = arith.subf %55, %75 : vector<8x128xf32>
    %77 = vector.broadcast %74 : vector<8x1xf32> to vector<8x128xf32>
    %78 = arith.mulf %76, %77 : vector<8x128xf32>
    %79 = arith.mulf %56, %78 : vector<8x128xf32>
    %80 = arith.addf %79, %57 : vector<8x128xf32>
    %c2_32 = arith.constant 2 : index
    %c0_33 = arith.constant 0 : index
    %c0_34 = arith.constant 0 : index
    %81 = vector.load %arg4[%c2_32, %c0_33, %c0_34] : memref<7x128x128xbf16, #tpu.memory_space<vmem>>, vector<1x128x128xbf16>
    %82 = vector.shape_cast %81 : vector<1x128x128xbf16> to vector<128x128xbf16>
    %c3 = arith.constant 3 : index
    %c0_35 = arith.constant 0 : index
    %c0_36 = arith.constant 0 : index
    %83 = vector.load %arg4[%c3, %c0_35, %c0_36] : memref<7x128x128xbf16, #tpu.memory_space<vmem>>, vector<1x128x128xbf16>
    %84 = vector.shape_cast %83 : vector<1x128x128xbf16> to vector<128x128xbf16>
    %c3_37 = arith.constant 3 : index
    %c0_38 = arith.constant 0 : index
    %85 = vector.load %arg5[%c3_37, %c0_38] : memref<8x768xf32, #tpu.memory_space<vmem>>, vector<1x128xf32>
    %c4 = arith.constant 4 : index
    %c0_39 = arith.constant 0 : index
    %86 = vector.load %arg5[%c4, %c0_39] : memref<8x768xf32, #tpu.memory_space<vmem>>, vector<1x128xf32>
    %87 = arith.truncf %80 : vector<8x128xf32> to vector<8x128xbf16>
    %cst_40 = arith.constant dense<0.000000e+00> : vector<8x128xf32>
    %88 = tpu.matmul %87, %82, %cst_40 {dimension_numbers = #tpu.dot_dimension_numbers<[1], [0], [0], [1], [0, 0, 1, 1], [], []>} : vector<8x128xbf16>, vector<128x128xbf16>, vector<8x128xf32> -> vector<8x128xf32>
    %89 = vector.broadcast %85 : vector<1x128xf32> to vector<8x128xf32>
    %90 = arith.addf %88, %89 : vector<8x128xf32>
    %91 = arith.negf %90 : vector<8x128xf32>
    %92 = math.exp %91 : vector<8x128xf32>
    %cst_41 = arith.constant 1.000000e+00 : f32
    %93 = vector.broadcast %cst_41 : f32 to vector<8x128xf32>
    %94 = arith.addf %93, %92 : vector<8x128xf32>
    %95 = arith.divf %93, %94 : vector<8x128xf32>
    %96 = arith.mulf %90, %95 : vector<8x128xf32>
    %97 = arith.truncf %96 : vector<8x128xf32> to vector<8x128xbf16>
    %cst_42 = arith.constant dense<0.000000e+00> : vector<8x128xf32>
    %98 = tpu.matmul %97, %84, %cst_42 {dimension_numbers = #tpu.dot_dimension_numbers<[1], [0], [0], [1], [0, 0, 1, 1], [], []>} : vector<8x128xbf16>, vector<128x128xbf16>, vector<8x128xf32> -> vector<8x128xf32>
    %99 = vector.broadcast %86 : vector<1x128xf32> to vector<8x128xf32>
    %100 = arith.addf %98, %99 : vector<8x128xf32>
    %101 = arith.addf %100, %55 : vector<8x128xf32>
    %102 = vector.extract_strided_slice %9 {offsets = [0, 256], sizes = [8, 128], strides = [1, 1]} : vector<8x768xf32> to vector<8x128xf32>
    %103 = vector.extract_strided_slice %9 {offsets = [0, 640], sizes = [8, 128], strides = [1, 1]} : vector<8x768xf32> to vector<8x128xf32>
    %cst_43 = arith.constant dense<0.000000e+00> : vector<8xf32>
    %104 = vector.multi_reduction <add>, %101, %cst_43 [1] : vector<8x128xf32> to vector<8xf32>
    %105 = vector.shape_cast %104 : vector<8xf32> to vector<8x1xf32>
    %106 = arith.mulf %101, %101 : vector<8x128xf32>
    %cst_44 = arith.constant dense<0.000000e+00> : vector<8xf32>
    %107 = vector.multi_reduction <add>, %106, %cst_44 [1] : vector<8x128xf32> to vector<8xf32>
    %108 = vector.shape_cast %107 : vector<8xf32> to vector<8x1xf32>
    %cst_45 = arith.constant 3.125000e-02 : f32
    %109 = vector.broadcast %cst_45 : f32 to vector<8x1xf32>
    %110 = arith.mulf %105, %109 : vector<8x1xf32>
    %cst_46 = arith.constant 3.125000e-02 : f32
    %111 = vector.broadcast %cst_46 : f32 to vector<8x1xf32>
    %112 = arith.mulf %108, %111 : vector<8x1xf32>
    %113 = arith.mulf %110, %110 : vector<8x1xf32>
    %114 = arith.subf %112, %113 : vector<8x1xf32>
    %cst_47 = arith.constant 0.000000e+00 : f32
    %115 = vector.broadcast %cst_47 : f32 to vector<8x1xf32>
    %116 = arith.maximumf %114, %115 : vector<8x1xf32>
    %117 = math.sqrt %116 : vector<8x1xf32>
    %cst_48 = arith.constant 9.99999974E-6 : f32
    %118 = vector.broadcast %cst_48 : f32 to vector<8x1xf32>
    %119 = arith.addf %117, %118 : vector<8x1xf32>
    %120 = tpu.reciprocal %119 {approx = true} : vector<8x1xf32> -> vector<8x1xf32>
    %121 = vector.broadcast %110 : vector<8x1xf32> to vector<8x128xf32>
    %122 = arith.subf %101, %121 : vector<8x128xf32>
    %123 = vector.broadcast %120 : vector<8x1xf32> to vector<8x128xf32>
    %124 = arith.mulf %122, %123 : vector<8x128xf32>
    %125 = arith.mulf %102, %124 : vector<8x128xf32>
    %126 = arith.addf %125, %103 : vector<8x128xf32>
    %c4_49 = arith.constant 4 : index
    %c0_50 = arith.constant 0 : index
    %c0_51 = arith.constant 0 : index
    %127 = vector.load %arg4[%c4_49, %c0_50, %c0_51] : memref<7x128x128xbf16, #tpu.memory_space<vmem>>, vector<1x128x128xbf16>
    %128 = vector.shape_cast %127 : vector<1x128x128xbf16> to vector<128x128xbf16>
    %c5 = arith.constant 5 : index
    %c0_52 = arith.constant 0 : index
    %c0_53 = arith.constant 0 : index
    %129 = vector.load %arg4[%c5, %c0_52, %c0_53] : memref<7x128x128xbf16, #tpu.memory_space<vmem>>, vector<1x128x128xbf16>
    %130 = vector.shape_cast %129 : vector<1x128x128xbf16> to vector<128x128xbf16>
    %c5_54 = arith.constant 5 : index
    %c0_55 = arith.constant 0 : index
    %131 = vector.load %arg5[%c5_54, %c0_55] : memref<8x768xf32, #tpu.memory_space<vmem>>, vector<1x128xf32>
    %c6 = arith.constant 6 : index
    %c0_56 = arith.constant 0 : index
    %132 = vector.load %arg5[%c6, %c0_56] : memref<8x768xf32, #tpu.memory_space<vmem>>, vector<1x128xf32>
    %133 = arith.truncf %126 : vector<8x128xf32> to vector<8x128xbf16>
    %cst_57 = arith.constant dense<0.000000e+00> : vector<8x128xf32>
    %134 = tpu.matmul %133, %128, %cst_57 {dimension_numbers = #tpu.dot_dimension_numbers<[1], [0], [0], [1], [0, 0, 1, 1], [], []>} : vector<8x128xbf16>, vector<128x128xbf16>, vector<8x128xf32> -> vector<8x128xf32>
    %135 = vector.broadcast %131 : vector<1x128xf32> to vector<8x128xf32>
    %136 = arith.addf %134, %135 : vector<8x128xf32>
    %137 = arith.negf %136 : vector<8x128xf32>
    %138 = math.exp %137 : vector<8x128xf32>
    %cst_58 = arith.constant 1.000000e+00 : f32
    %139 = vector.broadcast %cst_58 : f32 to vector<8x128xf32>
    %140 = arith.addf %139, %138 : vector<8x128xf32>
    %141 = arith.divf %139, %140 : vector<8x128xf32>
    %142 = arith.mulf %136, %141 : vector<8x128xf32>
    %143 = arith.truncf %142 : vector<8x128xf32> to vector<8x128xbf16>
    %cst_59 = arith.constant dense<0.000000e+00> : vector<8x128xf32>
    %144 = tpu.matmul %143, %130, %cst_59 {dimension_numbers = #tpu.dot_dimension_numbers<[1], [0], [0], [1], [0, 0, 1, 1], [], []>} : vector<8x128xbf16>, vector<128x128xbf16>, vector<8x128xf32> -> vector<8x128xf32>
    %145 = vector.broadcast %132 : vector<1x128xf32> to vector<8x128xf32>
    %146 = arith.addf %144, %145 : vector<8x128xf32>
    %147 = arith.addf %146, %101 : vector<8x128xf32>
    %c6_60 = arith.constant 6 : index
    %c0_61 = arith.constant 0 : index
    %c0_62 = arith.constant 0 : index
    %148 = vector.load %arg4[%c6_60, %c0_61, %c0_62] : memref<7x128x128xbf16, #tpu.memory_space<vmem>>, vector<1x128x128xbf16>
    %149 = vector.shape_cast %148 : vector<1x128x128xbf16> to vector<128x128xbf16>
    %c7 = arith.constant 7 : index
    %c0_63 = arith.constant 0 : index
    %150 = vector.load %arg5[%c7, %c0_63] : memref<8x768xf32, #tpu.memory_space<vmem>>, vector<1x128xf32>
    %151 = arith.truncf %147 : vector<8x128xf32> to vector<8x128xbf16>
    %cst_64 = arith.constant dense<0.000000e+00> : vector<8x128xf32>
    %152 = tpu.matmul %151, %149, %cst_64 {dimension_numbers = #tpu.dot_dimension_numbers<[1], [0], [0], [1], [0, 0, 1, 1], [], []>} : vector<8x128xbf16>, vector<128x128xbf16>, vector<8x128xf32> -> vector<8x128xf32>
    %153 = vector.broadcast %150 : vector<1x128xf32> to vector<8x128xf32>
    %154 = arith.addf %152, %153 : vector<8x128xf32>
    %c0_65 = arith.constant 0 : index
    %c0_66 = arith.constant 0 : index
    %155 = vector.load %arg6[%c0_65, %c0_66] : memref<8x128xf32, #tpu.memory_space<vmem>>, vector<8x128xf32>
    tpu.vector_store %arg6[%c0_65, %c0_66], %154 {strides = array<i32>} : memref<8x128xf32, #tpu.memory_space<vmem>>, vector<8x128xf32>,
    return
  }
}

</mosaic_0001>

<llo_original>
// kernel: denoising_mlp.1
$region0: #{denoising_mlp.1}
  #allocation0 [shape = 'u32[]', space=smem, size = 0x4, offset = 0x4, fixed_abs, tag = 'smem constant byte address 0x4 - core index']
  #allocation1 [shape = 'u32[72,128]{1,0:T(1,128)}', space=vmem, size = 0x9000, scoped, tag = 'internal scratch']
  %s0 = inlined_call_operand.vmem [shape: f32[8,128], index: 0, kind: input, shape index: {}]
  %s1 = inlined_call_operand.vmem [shape: f32[8,8], index: 1, kind: input, shape index: {}]
  %s2 = inlined_call_operand.vmem [shape: f32[8,8], index: 2, kind: input, shape index: {}]
  %s3 = inlined_call_operand.hbm [shape: bf16[8,768], index: 3, kind: input, shape index: {}]
  %s4 = inlined_call_operand.hbm [shape: bf16[7,128,128], index: 4, kind: input, shape index: {}]
  %s5 = inlined_call_operand.hbm [shape: f32[8,768], index: 5, kind: input, shape index: {}]
  %s6 = inlined_call_operand.hbm [shape: f32[8,128], index: 6, kind: output, shape index: {}]
  %s7 = sld [smem:[#allocation0]]
  $region46: #{denoising_mlp.1} parent=0
    _
  %s9 = ssub.s32 1, %s7
  %s10 = scalar_select 0, %s9, %s7
  $region1: #{denoising_mlp.1} parent=0
    #allocation2 [shape = 'u8[12288]{0}', space=vmem, size = 0x3000, scoped, tag = 'input window, operand 3, single buffered']
    #allocation3 [shape = 's32[1]{0}', space=sflag, size = 0x4, scoped, tag = 'scoped memory for denoising_mlp.1']
    #allocation4 [shape = 's32[1]{0}', space=sflag, size = 0x4, scoped, tag = 'scoped memory for denoising_mlp.1']
    #allocation5 [shape = 'u8[229376]{0}', space=vmem, size = 0x38000, scoped, tag = 'input window, operand 4, single buffered']
    #allocation6 [shape = 's32[1]{0}', space=sflag, size = 0x4, scoped, tag = 'scoped memory for denoising_mlp.1']
    #allocation7 [shape = 'u8[24576]{0}', space=vmem, size = 0x6000, scoped, tag = 'input window, operand 5, single buffered']
    #allocation8 [shape = 'u8[4096]{0}', space=vmem, size = 0x1000, scoped, tag = 'output window, operand 0, single buffered']
    %11 = vsyncpa [#allocation3], 0
    %12 = vsyncpa [#allocation6], 0
    %13 = vsyncpa [#allocation4], 0
    // Predicated region
    $region2: #{denoising_mlp.1} parent=1 // pred_check
      _
    $region3: #{denoising_mlp.1} parent=1 // pred_check_branch
      %15 = sbr.rel (0) target = $region5
    $region4: #{denoising_mlp.1} parent=1 // pred_region
      _
    $region5: #{denoising_mlp.1} parent=1 // pred_fallthru
      _
    // Predicated region
    $region6: #{denoising_mlp.1} parent=1 // pred_check
      _
    $region7: #{denoising_mlp.1} parent=1 // pred_check_branch
      %17 = sbr.rel (0) target = $region9
    $region8: #{denoising_mlp.1} parent=1 // pred_region
      _
    $region9: #{denoising_mlp.1} parent=1 // pred_fallthru
      _
    // Predicated region
    $region10: #{denoising_mlp.1} parent=1 // pred_check
      _
    $region11: #{denoising_mlp.1} parent=1 // pred_check_branch
      %19 = sbr.rel (0) target = $region13
    $region12: #{denoising_mlp.1} parent=1 // pred_region
      _
    $region13: #{denoising_mlp.1} parent=1 // pred_fallthru
      _
    // Predicated region
    $region14: #{denoising_mlp.1} parent=1 // pred_check
      _
    $region15: #{denoising_mlp.1} parent=1 // pred_check_branch
      %21 = sbr.rel (0) target = $region17
    $region16: #{denoising_mlp.1} parent=1 // pred_region
      %23 = vsyncadd [#allocation3], 0
      %s25 = sshll.u32 %s3, 4
      %s26 = int_to_ptr.hbm [resolvable:$true] %s25
      %s27 = sshll.u32 [#allocation2], 4
      %s28 = int_to_ptr.vmem [resolvable:$true] %s27
      %30 = dma.hbm_to_vmem [thread:$0]  %s26, 384, %s28, [#allocation3]
    $region17: #{denoising_mlp.1} parent=1 // pred_fallthru
      _
    // Predicated region
    $region18: #{denoising_mlp.1} parent=1 // pred_check
      _
    $region19: #{denoising_mlp.1} parent=1 // pred_check_branch
      %32 = sbr.rel (0) target = $region21
    $region20: #{denoising_mlp.1} parent=1 // pred_region
      %34 = vsyncadd [#allocation6], 0
      %s35 = sshll.u32 %s4, 4
      %s36 = int_to_ptr.hbm [resolvable:$true] %s35
      %s37 = sshll.u32 [#allocation5], 4
      %s38 = int_to_ptr.vmem [resolvable:$true] %s37
      %43 = dma.hbm_to_vmem [thread:$0]  %s36, 7168, %s38, [#allocation6], 64, 64, 4
    $region21: #{denoising_mlp.1} parent=1 // pred_fallthru
      _
    // Predicated region
    $region22: #{denoising_mlp.1} parent=1 // pred_check
      _
    $region23: #{denoising_mlp.1} parent=1 // pred_check_branch
      %45 = sbr.rel (0) target = $region25
    $region24: #{denoising_mlp.1} parent=1 // pred_region
      %47 = vsyncadd [#allocation6], 0
      %s49 = sshll.u32 %s5, 4
      %s50 = int_to_ptr.hbm [resolvable:$true] %s49
      %s51 = sshll.u32 [#allocation7], 4
      %s52 = int_to_ptr.vmem [resolvable:$true] %s51
      %54 = dma.hbm_to_vmem [thread:$0]  %s50, 768, %s52, [#allocation6]
    $region25: #{denoising_mlp.1} parent=1 // pred_fallthru
      _
    // Predicated region
    $region26: #{denoising_mlp.1} parent=1 // pred_check
      _
    $region27: #{denoising_mlp.1} parent=1 // pred_check_branch
      %56 = sbr.rel (0) target = $region29
    $region28: #{denoising_mlp.1} parent=1 // pred_region
      %58 = dma.done [#allocation3], 384
    $region29: #{denoising_mlp.1} parent=1 // pred_fallthru
      _
    // Predicated region
    $region30: #{denoising_mlp.1} parent=1 // pred_check
      _
    $region31: #{denoising_mlp.1} parent=1 // pred_check_branch
      %60 = sbr.rel (0) target = $region33
    $region32: #{denoising_mlp.1} parent=1 // pred_region
      %62 = dma.done [#allocation6], 7168
    $region33: #{denoising_mlp.1} parent=1 // pred_fallthru
      _
    // Predicated region
    $region34: #{denoising_mlp.1} parent=1 // pred_check
      _
    $region35: #{denoising_mlp.1} parent=1 // pred_check_branch
      %64 = sbr.rel (0) target = $region37
    $region36: #{denoising_mlp.1} parent=1 // pred_region
      %66 = dma.done [#allocation6], 768
    $region37: #{denoising_mlp.1} parent=1 // pred_fallthru
      _
    %v68 = vld [vmem:[%s0] sm:$0xff]
    %v69 = vld [vmem:[%s1] sm:$0xff]
    %v70 = vld [vmem:[%s2] sm:$0xff]
    %v71 = vadd.f32 %v69, %v70
    %v72 = vpack.c.bf16 %v71, %v71
    %v73 = vld [vmem:[#allocation2] sm:$0xff]
    %v74 = vld [vmem:[#allocation2 + $0x8] sm:$0xff]
    %v75 = vld [vmem:[#allocation2 + $0x10] sm:$0xff]
    %v76 = vld [vmem:[#allocation7] ss:$8 sm:$0xf]
    %v77 = vld [vmem:[#allocation7] ss:$8 sm:$0x30]
    %v78 = vor.u32 %v76, %v77
    %v80 = vperm.slane %v78, 0
    %v81 = vperm.slane %v78, 1
    %v82 = vperm.slane %v78, 2
    %v83 = vperm.slane %v78, 3
    %v84 = vperm.slane %v78, 4
    %v85 = vperm.slane %v78, 5
    %v95 = vunpack.c.l.b16 %v73
    %v96 = vunpack.c.h.b16 %v73
    %v97 = vunpack.c.l.b16 %v74
    %v98 = vunpack.c.h.b16 %v74
    %v99 = vunpack.c.l.b16 %v75
    %v100 = vunpack.c.h.b16 %v75
    %v101 = vpack.c.b16 %v95, %v95
    %v102 = vpack.c.b16 %v96, %v96
    %v103 = vpack.c.b16 %v97, %v97
    %v104 = vpack.c.b16 %v98, %v98
    %v105 = vpack.c.b16 %v99, %v99
    %v106 = vpack.c.b16 %v100, %v100
    %vm107 = vcmask 64512
    %v109 = vsel %vm107, %v72, 0
    %vm111 = vcmask 1043456
    %v113 = vsel %vm111, %v101, 0
    %v116 = vsel %vm111, %v102, 0
    %v119 = vsel %vm111, %v103, 0
    %v122 = vsel %vm111, %v104, 0
    %v125 = vsel %vm111, %v105, 0
    %v128 = vsel %vm111, %v106, 0
    %130 = vmatpush.bf16.msra.mxu0 0
    %131 = vmatpush.bf16.msra.mxu0 0
    %132 = vmatpush.bf16.msra.mxu0 0
    %133 = vmatpush.bf16.msra.mxu0 0
    %134 = vmatpush.bf16.msra.mxu0 0
    %135 = vmatpush.bf16.msra.mxu0 0
    %136 = vmatpush.bf16.msra.mxu0 0
    %137 = vmatpush.bf16.msra.mxu0 %v113
    %138 = vmatmul.bf16.gmra.mxu0 %v109
    %v139 = vpop.f32.mrf.mxu0
    %v140 = vadd.f32 %v80, %v139
    %v141 = vpop.f32.mrf.mxu0
    %142 = vdwg.mxu0
    %143 = vmatpush.bf16.msra.mxu0 0
    %144 = vmatpush.bf16.msra.mxu0 0
    %145 = vmatpush.bf16.msra.mxu0 0
    %146 = vmatpush.bf16.msra.mxu0 0
    %147 = vmatpush.bf16.msra.mxu0 0
    %148 = vmatpush.bf16.msra.mxu0 0
    %149 = vmatpush.bf16.msra.mxu0 0
    %150 = vmatpush.bf16.msra.mxu0 %v116
    %151 = vmatmul.bf16.gmra.mxu0 %v109
    %v152 = vpop.f32.mrf.mxu0
    %v153 = vadd.f32 %v81, %v152
    %v154 = vpop.f32.mrf.mxu0
    %155 = vdwg.mxu0
    %156 = vmatpush.bf16.msra.mxu0 0
    %157 = vmatpush.bf16.msra.mxu0 0
    %158 = vmatpush.bf16.msra.mxu0 0
    %159 = vmatpush.bf16.msra.mxu0 0
    %160 = vmatpush.bf16.msra.mxu0 0
    %161 = vmatpush.bf16.msra.mxu0 0
    %162 = vmatpush.bf16.msra.mxu0 0
    %163 = vmatpush.bf16.msra.mxu0 %v119
    %164 = vmatmul.bf16.gmra.mxu0 %v109
    %v165 = vpop.f32.mrf.mxu0
    %v166 = vadd.f32 %v82, %v165
    %v167 = vpop.f32.mrf.mxu0
    %168 = vdwg.mxu0
    %169 = vmatpush.bf16.msra.mxu0 0
    %170 = vmatpush.bf16.msra.mxu0 0
    %171 = vmatpush.bf16.msra.mxu0 0
    %172 = vmatpush.bf16.msra.mxu0 0
    %173 = vmatpush.bf16.msra.mxu0 0
    %174 = vmatpush.bf16.msra.mxu0 0
    %175 = vmatpush.bf16.msra.mxu0 0
    %176 = vmatpush.bf16.msra.mxu0 %v122
    %177 = vmatmul.bf16.gmra.mxu0 %v109
    %v178 = vpop.f32.mrf.mxu0
    %v179 = vadd.f32 %v83, %v178
    %v180 = vpop.f32.mrf.mxu0
    %181 = vdwg.mxu0
    %182 = vmatpush.bf16.msra.mxu0 0
    %183 = vmatpush.bf16.msra.mxu0 0
    %184 = vmatpush.bf16.msra.mxu0 0
    %185 = vmatpush.bf16.msra.mxu0 0
    %186 = vmatpush.bf16.msra.mxu0 0
    %187 = vmatpush.bf16.msra.mxu0 0
    %188 = vmatpush.bf16.msra.mxu0 0
    %189 = vmatpush.bf16.msra.mxu0 %v125
    %190 = vmatmul.bf16.gmra.mxu0 %v109
    %v191 = vpop.f32.mrf.mxu0
    %v192 = vadd.f32 %v84, %v191
    %v193 = vpop.f32.mrf.mxu0
    %194 = vdwg.mxu0
    %195 = vmatpush.bf16.msra.mxu0 0
    %196 = vmatpush.bf16.msra.mxu0 0
    %197 = vmatpush.bf16.msra.mxu0 0
    %198 = vmatpush.bf16.msra.mxu0 0
    %199 = vmatpush.bf16.msra.mxu0 0
    %200 = vmatpush.bf16.msra.mxu0 0
    %201 = vmatpush.bf16.msra.mxu0 0
    %202 = vmatpush.bf16.msra.mxu0 %v128
    %203 = vmatmul.bf16.gmra.mxu0 %v109
    %v204 = vpop.f32.mrf.mxu0
    %v205 = vadd.f32 %v85, %v204
    %v206 = vpop.f32.mrf.mxu0
    %207 = vdwg.mxu0
    %208 = vadd.xlane.f32.xlu0 %v68
    %v209 = vpop.xlane.xlu0 %208
    %v210 = vmul.f32 %v68, %v68
    %211 = vadd.xlane.f32.xlu0 %v210
    %v212 = vpop.xlane.xlu0 %211
    %v213 = vmul.f32 %v209, 0.03125
    %v214 = vmul.f32 %v212, 0.03125
    %v215 = vmul.f32 %v213, %v213
    %v216 = vsub.f32 %v214, %v215
    %v217 = vmax.f32 %v216, 0.0
    %v218 = vrsqrt.pop %v217
    %v219 = vmul.f32 %v218, %v217
    %v220 = vmul.f32 %v219, %v218
    %v221 = vmul.f32 0.5, %v220
    %v222 = vsub.f32 1.5, %v221
    %v223 = vmul.f32 %v218, %v222
    %v224 = vmul.f32 %v217, %v223
    %vm225 = vcmp.eq.f32.partialorder %v217, inf
    %v226 = vsel %vm225, %v217, %v224
    %vm227 = vcmp.eq.f32.partialorder %v217, 0.0
    %v228 = vand.u32 %v217, 2147483648
    %v229 = vsel %vm227, %v228, %v226
    %v230 = vadd.f32 %v229, 1e-05
    %v231 = vrcp.pop %v230
    %v232 = vsub.f32 %v68, %v213
    %v233 = vmul.f32 %v232, %v231
    %v234 = vmul.f32 %v140, %v233
    %v235 = vadd.f32 %v234, %v179
    %v236 = vld [vmem:[#allocation5] sm:$0xf]
    %v237 = vld [vmem:[#allocation5 + $0x4] sm:$0xf]
    %v238 = vld [vmem:[#allocation5 + $0x8] sm:$0xf]
    %v239 = vld [vmem:[#allocation5 + $0xc] sm:$0xf]
    %v240 = vld [vmem:[#allocation5 + $0x10] sm:$0xf]
    %v241 = vld [vmem:[#allocation5 + $0x14] sm:$0xf]
    %v242 = vld [vmem:[#allocation5 + $0x18] sm:$0xf]
    %v243 = vld [vmem:[#allocation5 + $0x1c] sm:$0xf]
    %v244 = vld [vmem:[#allocation5 + $0x20] sm:$0xf]
    %v245 = vld [vmem:[#allocation5 + $0x24] sm:$0xf]
    %v246 = vld [vmem:[#allocation5 + $0x28] sm:$0xf]
    %v247 = vld [vmem:[#allocation5 + $0x2c] sm:$0xf]
    %v248 = vld [vmem:[#allocation5 + $0x30] sm:$0xf]
    %v249 = vld [vmem:[#allocation5 + $0x34] sm:$0xf]
    %v250 = vld [vmem:[#allocation5 + $0x38] sm:$0xf]
    %v251 = vld [vmem:[#allocation5 + $0x3c] sm:$0xf]
    %s252 = scalar_lea.vmem [#allocation5], 64
    %v253 = vld [vmem:[%s252] sm:$0xf]
    %v254 = vld [vmem:[%s252 + $0x4] sm:$0xf]
    %v255 = vld [vmem:[%s252 + $0x8] sm:$0xf]
    %v256 = vld [vmem:[%s252 + $0xc] sm:$0xf]
    %v257 = vld [vmem:[%s252 + $0x10] sm:$0xf]
    %v258 = vld [vmem:[%s252 + $0x14] sm:$0xf]
    %v259 = vld [vmem:[%s252 + $0x18] sm:$0xf]
    %v260 = vld [vmem:[%s252 + $0x1c] sm:$0xf]
    %v261 = vld [vmem:[%s252 + $0x20] sm:$0xf]
    %v262 = vld [vmem:[%s252 + $0x24] sm:$0xf]
    %v263 = vld [vmem:[%s252 + $0x28] sm:$0xf]
    %v264 = vld [vmem:[%s252 + $0x2c] sm:$0xf]
    %v265 = vld [vmem:[%s252 + $0x30] sm:$0xf]
    %v266 = vld [vmem:[%s252 + $0x34] sm:$0xf]
    %v267 = vld [vmem:[%s252 + $0x38] sm:$0xf]
    %v268 = vld [vmem:[%s252 + $0x3c] sm:$0xf]
    %v269 = vld [vmem:[#allocation7 + $0x1] ss:$0 sm:$0xff]
    %v270 = vld [vmem:[#allocation7 + $0x2] ss:$0 sm:$0xff]
    %v271 = vpack.c.bf16 %v235, %v235
    %v288 = vunpack.c.l.b16 %v236
    %v289 = vunpack.c.l.b16 %v237
    %v290 = vunpack.c.l.b16 %v238
    %v291 = vunpack.c.l.b16 %v239
    %v292 = vunpack.c.l.b16 %v240
    %v293 = vunpack.c.l.b16 %v241
    %v294 = vunpack.c.l.b16 %v242
    %v295 = vunpack.c.l.b16 %v243
    %v296 = vunpack.c.l.b16 %v244
    %v297 = vunpack.c.l.b16 %v245
    %v298 = vunpack.c.l.b16 %v246
    %v299 = vunpack.c.l.b16 %v247
    %v300 = vunpack.c.l.b16 %v248
    %v301 = vunpack.c.l.b16 %v249
    %v302 = vunpack.c.l.b16 %v250
    %v303 = vunpack.c.l.b16 %v251
    %v304 = vpack.c.b16 %v289, %v288
    %v305 = vpack.c.b16 %v291, %v290
    %v306 = vpack.c.b16 %v293, %v292
    %v307 = vpack.c.b16 %v295, %v294
    %v308 = vpack.c.b16 %v297, %v296
    %v309 = vpack.c.b16 %v299, %v298
    %v310 = vpack.c.b16 %v301, %v300
    %v311 = vpack.c.b16 %v303, %v302
    %320 = vmatpush.bf16.msra.mxu0 %v311
    %321 = vmatpush.bf16.msra.mxu0 %v310
    %322 = vmatpush.bf16.msra.mxu0 %v309
    %323 = vmatpush.bf16.msra.mxu0 %v308
    %324 = vmatpush.bf16.msra.mxu0 %v307
    %325 = vmatpush.bf16.msra.mxu0 %v306
    %326 = vmatpush.bf16.msra.mxu0 %v305
    %327 = vmatpush.bf16.msra.mxu0 %v304
    %328 = vmatmul.bf16.gmra.mxu0 %v271
    %v329 = vpop.f32.mrf.mxu0
    %v330 = vadd.f32 %v269, %v329
    %v331 = vpop.f32.mrf.mxu0
    %332 = vdwg.mxu0
    %v333 = vxor.u32 %v330, 2147483648
    %v334 = vmul.f32 %v333, 1.442695
    %v335 = vpow.pop %v334
    %v336 = vadd.f32 %v335, 1.0
    %v337 = vrcp.pop %v336
    %v338 = vmul.f32 %v336, %v337
    %v339 = vsub.f32 1.0, %v338
    %v340 = vmul.f32 %v337, %v339
    %v341 = vadd.f32 %v337, %v340
    %vm342 = vweird.f32 %v336
    %vm343 = vweird.f32 %v337
    %vm344 = vmor %vm342, %vm343
    %v345 = vsel %vm344, %v337, %v341
    %v346 = vand.u32 2147483647, %v336
    %vm347 = vcmp.eq.f32.partialorder %v346, 8.507059e+37
    %v348 = vand.u32 %v336, 2147483648
    %v349 = vor.u32 1.1754944e-38, %v348
    %v350 = vsel %vm347, %v349, %v345
    %v351 = vmul.f32 1.0, %v350
    %v352 = vmul.f32 %v330, %v351
    %v353 = vpack.c.bf16 %v352, %v352
    %v370 = vunpack.c.l.b16 %v253
    %v371 = vunpack.c.l.b16 %v254
    %v372 = vunpack.c.l.b16 %v255
    %v373 = vunpack.c.l.b16 %v256
    %v374 = vunpack.c.l.b16 %v257
    %v375 = vunpack.c.l.b16 %v258
    %v376 = vunpack.c.l.b16 %v259
    %v377 = vunpack.c.l.b16 %v260
    %v378 = vunpack.c.l.b16 %v261
    %v379 = vunpack.c.l.b16 %v262
    %v380 = vunpack.c.l.b16 %v263
    %v381 = vunpack.c.l.b16 %v264
    %v382 = vunpack.c.l.b16 %v265
    %v383 = vunpack.c.l.b16 %v266
    %v384 = vunpack.c.l.b16 %v267
    %v385 = vunpack.c.l.b16 %v268
    %v386 = vpack.c.b16 %v371, %v370
    %v387 = vpack.c.b16 %v373, %v372
    %v388 = vpack.c.b16 %v375, %v374
    %v389 = vpack.c.b16 %v377, %v376
    %v390 = vpack.c.b16 %v379, %v378
    %v391 = vpack.c.b16 %v381, %v380
    %v392 = vpack.c.b16 %v383, %v382
    %v393 = vpack.c.b16 %v385, %v384
    %402 = vmatpush.bf16.msra.mxu0 %v393
    %403 = vmatpush.bf16.msra.mxu0 %v392
    %404 = vmatpush.bf16.msra.mxu0 %v391
    %405 = vmatpush.bf16.msra.mxu0 %v390
    %406 = vmatpush.bf16.msra.mxu0 %v389
    %407 = vmatpush.bf16.msra.mxu0 %v388
    %408 = vmatpush.bf16.msra.mxu0 %v387
    %409 = vmatpush.bf16.msra.mxu0 %v386
    %410 = vmatmul.bf16.gmra.mxu0 %v353
    %v411 = vpop.f32.mrf.mxu0
    %v412 = vadd.f32 %v270, %v411
    %v413 = vpop.f32.mrf.mxu0
    %414 = vdwg.mxu0
    %v415 = vadd.f32 %v412, %v68
    %416 = vadd.xlane.f32.xlu0 %v415
    %v417 = vpop.xlane.xlu0 %416
    %v418 = vmul.f32 %v415, %v415
    %419 = vadd.xlane.f32.xlu0 %v418
    %v420 = vpop.xlane.xlu0 %419
    %v421 = vmul.f32 %v417, 0.03125
    %v422 = vmul.f32 %v420, 0.03125
    %v423 = vmul.f32 %v421, %v421
    %v424 = vsub.f32 %v422, %v423
    %v425 = vmax.f32 %v424, 0.0
    %v426 = vrsqrt.pop %v425
    %v427 = vmul.f32 %v426, %v425
    %v428 = vmul.f32 %v427, %v426
    %v429 = vmul.f32 0.5, %v428
    %v430 = vsub.f32 1.5, %v429
    %v431 = vmul.f32 %v426, %v430
    %v432 = vmul.f32 %v425, %v431
    %vm433 = vcmp.eq.f32.partialorder %v425, inf
    %v434 = vsel %vm433, %v425, %v432
    %vm435 = vcmp.eq.f32.partialorder %v425, 0.0
    %v436 = vand.u32 %v425, 2147483648
    %v437 = vsel %vm435, %v436, %v434
    %v438 = vadd.f32 %v437, 1e-05
    %v439 = vrcp.pop %v438
    %v440 = vsub.f32 %v415, %v421
    %v441 = vmul.f32 %v440, %v439
    %v442 = vmul.f32 %v153, %v441
    %v443 = vadd.f32 %v442, %v192
    %s444 = scalar_lea.vmem [#allocation5], 128
    %v445 = vld [vmem:[%s444] sm:$0xf]
    %v446 = vld [vmem:[%s444 + $0x4] sm:$0xf]
    %v447 = vld [vmem:[%s444 + $0x8] sm:$0xf]
    %v448 = vld [vmem:[%s444 + $0xc] sm:$0xf]
    %v449 = vld [vmem:[%s444 + $0x10] sm:$0xf]
    %v450 = vld [vmem:[%s444 + $0x14] sm:$0xf]
    %v451 = vld [vmem:[%s444 + $0x18] sm:$0xf]
    %v452 = vld [vmem:[%s444 + $0x1c] sm:$0xf]
    %v453 = vld [vmem:[%s444 + $0x20] sm:$0xf]
    %v454 = vld [vmem:[%s444 + $0x24] sm:$0xf]
    %v455 = vld [vmem:[%s444 + $0x28] sm:$0xf]
    %v456 = vld [vmem:[%s444 + $0x2c] sm:$0xf]
    %v457 = vld [vmem:[%s444 + $0x30] sm:$0xf]
    %v458 = vld [vmem:[%s444 + $0x34] sm:$0xf]
    %v459 = vld [vmem:[%s444 + $0x38] sm:$0xf]
    %v460 = vld [vmem:[%s444 + $0x3c] sm:$0xf]
    %s461 = scalar_lea.vmem [#allocation5], 192
    %v462 = vld [vmem:[%s461] sm:$0xf]
    %v463 = vld [vmem:[%s461 + $0x4] sm:$0xf]
    %v464 = vld [vmem:[%s461 + $0x8] sm:$0xf]
    %v465 = vld [vmem:[%s461 + $0xc] sm:$0xf]
    %v466 = vld [vmem:[%s461 + $0x10] sm:$0xf]
    %v467 = vld [vmem:[%s461 + $0x14] sm:$0xf]
    %v468 = vld [vmem:[%s461 + $0x18] sm:$0xf]
    %v469 = vld [vmem:[%s461 + $0x1c] sm:$0xf]
    %v470 = vld [vmem:[%s461 + $0x20] sm:$0xf]
    %v471 = vld [vmem:[%s461 + $0x24] sm:$0xf]
    %v472 = vld [vmem:[%s461 + $0x28] sm:$0xf]
    %v473 = vld [vmem:[%s461 + $0x2c] sm:$0xf]
    %v474 = vld [vmem:[%s461 + $0x30] sm:$0xf]
    %v475 = vld [vmem:[%s461 + $0x34] sm:$0xf]
    %v476 = vld [vmem:[%s461 + $0x38] sm:$0xf]
    %v477 = vld [vmem:[%s461 + $0x3c] sm:$0xf]
    %v478 = vld [vmem:[#allocation7 + $0x3] ss:$0 sm:$0xff]
    %v479 = vld [vmem:[#allocation7 + $0x4] ss:$0 sm:$0xff]
    %v480 = vpack.c.bf16 %v443, %v443
    %v497 = vunpack.c.l.b16 %v445
    %v498 = vunpack.c.l.b16 %v446
    %v499 = vunpack.c.l.b16 %v447
    %v500 = vunpack.c.l.b16 %v448
    %v501 = vunpack.c.l.b16 %v449
    %v502 = vunpack.c.l.b16 %v450
    %v503 = vunpack.c.l.b16 %v451
    %v504 = vunpack.c.l.b16 %v452
    %v505 = vunpack.c.l.b16 %v453
    %v506 = vunpack.c.l.b16 %v454
    %v507 = vunpack.c.l.b16 %v455
    %v508 = vunpack.c.l.b16 %v456
    %v509 = vunpack.c.l.b16 %v457
    %v510 = vunpack.c.l.b16 %v458
    %v511 = vunpack.c.l.b16 %v459
    %v512 = vunpack.c.l.b16 %v460
    %v513 = vpack.c.b16 %v498, %v497
    %v514 = vpack.c.b16 %v500, %v499
    %v515 = vpack.c.b16 %v502, %v501
    %v516 = vpack.c.b16 %v504, %v503
    %v517 = vpack.c.b16 %v506, %v505
    %v518 = vpack.c.b16 %v508, %v507
    %v519 = vpack.c.b16 %v510, %v509
    %v520 = vpack.c.b16 %v512, %v511
    %529 = vmatpush.bf16.msra.mxu0 %v520
    %530 = vmatpush.bf16.msra.mxu0 %v519
    %531 = vmatpush.bf16.msra.mxu0 %v518
    %532 = vmatpush.bf16.msra.mxu0 %v517
    %533 = vmatpush.bf16.msra.mxu0 %v516
    %534 = vmatpush.bf16.msra.mxu0 %v515
    %535 = vmatpush.bf16.msra.mxu0 %v514
    %536 = vmatpush.bf16.msra.mxu0 %v513
    %537 = vmatmul.bf16.gmra.mxu0 %v480
    %v538 = vpop.f32.mrf.mxu0
    %v539 = vadd.f32 %v478, %v538
    %v540 = vpop.f32.mrf.mxu0
    %541 = vdwg.mxu0
    %v542 = vxor.u32 %v539, 2147483648
    %v543 = vmul.f32 %v542, 1.442695
    %v544 = vpow.pop %v543
    %v545 = vadd.f32 %v544, 1.0
    %v546 = vrcp.pop %v545
    %v547 = vmul.f32 %v545, %v546
    %v548 = vsub.f32 1.0, %v547
    %v549 = vmul.f32 %v546, %v548
    %v550 = vadd.f32 %v546, %v549
    %vm551 = vweird.f32 %v545
    %vm552 = vweird.f32 %v546
    %vm553 = vmor %vm551, %vm552
    %v554 = vsel %vm553, %v546, %v550
    %v555 = vand.u32 2147483647, %v545
    %vm556 = vcmp.eq.f32.partialorder %v555, 8.507059e+37
    %v557 = vand.u32 %v545, 2147483648
    %v558 = vor.u32 1.1754944e-38, %v557
    %v559 = vsel %vm556, %v558, %v554
    %v560 = vmul.f32 1.0, %v559
    %v561 = vmul.f32 %v539, %v560
    %v562 = vpack.c.bf16 %v561, %v561
    %v579 = vunpack.c.l.b16 %v462
    %v580 = vunpack.c.l.b16 %v463
    %v581 = vunpack.c.l.b16 %v464
    %v582 = vunpack.c.l.b16 %v465
    %v583 = vunpack.c.l.b16 %v466
    %v584 = vunpack.c.l.b16 %v467
    %v585 = vunpack.c.l.b16 %v468
    %v586 = vunpack.c.l.b16 %v469
    %v587 = vunpack.c.l.b16 %v470
    %v588 = vunpack.c.l.b16 %v471
    %v589 = vunpack.c.l.b16 %v472
    %v590 = vunpack.c.l.b16 %v473
    %v591 = vunpack.c.l.b16 %v474
    %v592 = vunpack.c.l.b16 %v475
    %v593 = vunpack.c.l.b16 %v476
    %v594 = vunpack.c.l.b16 %v477
    %v595 = vpack.c.b16 %v580, %v579
    %v596 = vpack.c.b16 %v582, %v581
    %v597 = vpack.c.b16 %v584, %v583
    %v598 = vpack.c.b16 %v586, %v585
    %v599 = vpack.c.b16 %v588, %v587
    %v600 = vpack.c.b16 %v590, %v589
    %v601 = vpack.c.b16 %v592, %v591
    %v602 = vpack.c.b16 %v594, %v593
    %611 = vmatpush.bf16.msra.mxu0 %v602
    %612 = vmatpush.bf16.msra.mxu0 %v601
    %613 = vmatpush.bf16.msra.mxu0 %v600
    %614 = vmatpush.bf16.msra.mxu0 %v599
    %615 = vmatpush.bf16.msra.mxu0 %v598
    %616 = vmatpush.bf16.msra.mxu0 %v597
    %617 = vmatpush.bf16.msra.mxu0 %v596
    %618 = vmatpush.bf16.msra.mxu0 %v595
    %619 = vmatmul.bf16.gmra.mxu0 %v562
    %v620 = vpop.f32.mrf.mxu0
    %v621 = vadd.f32 %v479, %v620
    %v622 = vpop.f32.mrf.mxu0
    %623 = vdwg.mxu0
    %v624 = vadd.f32 %v621, %v415
    %625 = vadd.xlane.f32.xlu0 %v624
    %v626 = vpop.xlane.xlu0 %625
    %v627 = vmul.f32 %v624, %v624
    %628 = vadd.xlane.f32.xlu0 %v627
    %v629 = vpop.xlane.xlu0 %628
    %v630 = vmul.f32 %v626, 0.03125
    %v631 = vmul.f32 %v629, 0.03125
    %v632 = vmul.f32 %v630, %v630
    %v633 = vsub.f32 %v631, %v632
    %v634 = vmax.f32 %v633, 0.0
    %v635 = vrsqrt.pop %v634
    %v636 = vmul.f32 %v635, %v634
    %v637 = vmul.f32 %v636, %v635
    %v638 = vmul.f32 0.5, %v637
    %v639 = vsub.f32 1.5, %v638
    %v640 = vmul.f32 %v635, %v639
    %v641 = vmul.f32 %v634, %v640
    %vm642 = vcmp.eq.f32.partialorder %v634, inf
    %v643 = vsel %vm642, %v634, %v641
    %vm644 = vcmp.eq.f32.partialorder %v634, 0.0
    %v645 = vand.u32 %v634, 2147483648
    %v646 = vsel %vm644, %v645, %v643
    %v647 = vadd.f32 %v646, 1e-05
    %v648 = vrcp.pop %v647
    %v649 = vsub.f32 %v624, %v630
    %v650 = vmul.f32 %v649, %v648
    %v651 = vmul.f32 %v166, %v650
    %v652 = vadd.f32 %v651, %v205
    %s653 = scalar_lea.vmem [#allocation5], 256
    %v654 = vld [vmem:[%s653] sm:$0xf]
    %v655 = vld [vmem:[%s653 + $0x4] sm:$0xf]
    %v656 = vld [vmem:[%s653 + $0x8] sm:$0xf]
    %v657 = vld [vmem:[%s653 + $0xc] sm:$0xf]
    %v658 = vld [vmem:[%s653 + $0x10] sm:$0xf]
    %v659 = vld [vmem:[%s653 + $0x14] sm:$0xf]
    %v660 = vld [vmem:[%s653 + $0x18] sm:$0xf]
    %v661 = vld [vmem:[%s653 + $0x1c] sm:$0xf]
    %v662 = vld [vmem:[%s653 + $0x20] sm:$0xf]
    %v663 = vld [vmem:[%s653 + $0x24] sm:$0xf]
    %v664 = vld [vmem:[%s653 + $0x28] sm:$0xf]
    %v665 = vld [vmem:[%s653 + $0x2c] sm:$0xf]
    %v666 = vld [vmem:[%s653 + $0x30] sm:$0xf]
    %v667 = vld [vmem:[%s653 + $0x34] sm:$0xf]
    %v668 = vld [vmem:[%s653 + $0x38] sm:$0xf]
    %v669 = vld [vmem:[%s653 + $0x3c] sm:$0xf]
    %s670 = scalar_lea.vmem [#allocation5], 320
    %v671 = vld [vmem:[%s670] sm:$0xf]
    %v672 = vld [vmem:[%s670 + $0x4] sm:$0xf]
    %v673 = vld [vmem:[%s670 + $0x8] sm:$0xf]
    %v674 = vld [vmem:[%s670 + $0xc] sm:$0xf]
    %v675 = vld [vmem:[%s670 + $0x10] sm:$0xf]
    %v676 = vld [vmem:[%s670 + $0x14] sm:$0xf]
    %v677 = vld [vmem:[%s670 + $0x18] sm:$0xf]
    %v678 = vld [vmem:[%s670 + $0x1c] sm:$0xf]
    %v679 = vld [vmem:[%s670 + $0x20] sm:$0xf]
    %v680 = vld [vmem:[%s670 + $0x24] sm:$0xf]
    %v681 = vld [vmem:[%s670 + $0x28] sm:$0xf]
    %v682 = vld [vmem:[%s670 + $0x2c] sm:$0xf]
    %v683 = vld [vmem:[%s670 + $0x30] sm:$0xf]
    %v684 = vld [vmem:[%s670 + $0x34] sm:$0xf]
    %v685 = vld [vmem:[%s670 + $0x38] sm:$0xf]
    %v686 = vld [vmem:[%s670 + $0x3c] sm:$0xf]
    %v687 = vld [vmem:[#allocation7 + $0x5] ss:$0 sm:$0xff]
    %v688 = vld [vmem:[#allocation7 + $0x6] ss:$0 sm:$0xff]
    %v689 = vpack.c.bf16 %v652, %v652
    %v706 = vunpack.c.l.b16 %v654
    %v707 = vunpack.c.l.b16 %v655
    %v708 = vunpack.c.l.b16 %v656
    %v709 = vunpack.c.l.b16 %v657
    %v710 = vunpack.c.l.b16 %v658
    %v711 = vunpack.c.l.b16 %v659
    %v712 = vunpack.c.l.b16 %v660
    %v713 = vunpack.c.l.b16 %v661
    %v714 = vunpack.c.l.b16 %v662
    %v715 = vunpack.c.l.b16 %v663
    %v716 = vunpack.c.l.b16 %v664
    %v717 = vunpack.c.l.b16 %v665
    %v718 = vunpack.c.l.b16 %v666
    %v719 = vunpack.c.l.b16 %v667
    %v720 = vunpack.c.l.b16 %v668
    %v721 = vunpack.c.l.b16 %v669
    %v722 = vpack.c.b16 %v707, %v706
    %v723 = vpack.c.b16 %v709, %v708
    %v724 = vpack.c.b16 %v711, %v710
    %v725 = vpack.c.b16 %v713, %v712
    %v726 = vpack.c.b16 %v715, %v714
    %v727 = vpack.c.b16 %v717, %v716
    %v728 = vpack.c.b16 %v719, %v718
    %v729 = vpack.c.b16 %v721, %v720
    %738 = vmatpush.bf16.msra.mxu0 %v729
    %739 = vmatpush.bf16.msra.mxu0 %v728
    %740 = vmatpush.bf16.msra.mxu0 %v727
    %741 = vmatpush.bf16.msra.mxu0 %v726
    %742 = vmatpush.bf16.msra.mxu0 %v725
    %743 = vmatpush.bf16.msra.mxu0 %v724
    %744 = vmatpush.bf16.msra.mxu0 %v723
    %745 = vmatpush.bf16.msra.mxu0 %v722
    %746 = vmatmul.bf16.gmra.mxu0 %v689
    %v747 = vpop.f32.mrf.mxu0
    %v748 = vadd.f32 %v687, %v747
    %v749 = vpop.f32.mrf.mxu0
    %750 = vdwg.mxu0
    %v751 = vxor.u32 %v748, 2147483648
    %v752 = vmul.f32 %v751, 1.442695
    %v753 = vpow.pop %v752
    %v754 = vadd.f32 %v753, 1.0
    %v755 = vrcp.pop %v754
    %v756 = vmul.f32 %v754, %v755
    %v757 = vsub.f32 1.0, %v756
    %v758 = vmul.f32 %v755, %v757
    %v759 = vadd.f32 %v755, %v758
    %vm760 = vweird.f32 %v754
    %vm761 = vweird.f32 %v755
    %vm762 = vmor %vm760, %vm761
    %v763 = vsel %vm762, %v755, %v759
    %v764 = vand.u32 2147483647, %v754
    %vm765 = vcmp.eq.f32.partialorder %v764, 8.507059e+37
    %v766 = vand.u32 %v754, 2147483648
    %v767 = vor.u32 1.1754944e-38, %v766
    %v768 = vsel %vm765, %v767, %v763
    %v769 = vmul.f32 1.0, %v768
    %v770 = vmul.f32 %v748, %v769
    %v771 = vpack.c.bf16 %v770, %v770
    %v788 = vunpack.c.l.b16 %v671
    %v789 = vunpack.c.l.b16 %v672
    %v790 = vunpack.c.l.b16 %v673
    %v791 = vunpack.c.l.b16 %v674
    %v792 = vunpack.c.l.b16 %v675
    %v793 = vunpack.c.l.b16 %v676
    %v794 = vunpack.c.l.b16 %v677
    %v795 = vunpack.c.l.b16 %v678
    %v796 = vunpack.c.l.b16 %v679
    %v797 = vunpack.c.l.b16 %v680
    %v798 = vunpack.c.l.b16 %v681
    %v799 = vunpack.c.l.b16 %v682
    %v800 = vunpack.c.l.b16 %v683
    %v801 = vunpack.c.l.b16 %v684
    %v802 = vunpack.c.l.b16 %v685
    %v803 = vunpack.c.l.b16 %v686
    %v804 = vpack.c.b16 %v789, %v788
    %v805 = vpack.c.b16 %v791, %v790
    %v806 = vpack.c.b16 %v793, %v792
    %v807 = vpack.c.b16 %v795, %v794
    %v808 = vpack.c.b16 %v797, %v796
    %v809 = vpack.c.b16 %v799, %v798
    %v810 = vpack.c.b16 %v801, %v800
    %v811 = vpack.c.b16 %v803, %v802
    %820 = vmatpush.bf16.msra.mxu0 %v811
    %821 = vmatpush.bf16.msra.mxu0 %v810
    %822 = vmatpush.bf16.msra.mxu0 %v809
    %823 = vmatpush.bf16.msra.mxu0 %v808
    %824 = vmatpush.bf16.msra.mxu0 %v807
    %825 = vmatpush.bf16.msra.mxu0 %v806
    %826 = vmatpush.bf16.msra.mxu0 %v805
    %827 = vmatpush.bf16.msra.mxu0 %v804
    %828 = vmatmul.bf16.gmra.mxu0 %v771
    %v829 = vpop.f32.mrf.mxu0
    %v830 = vadd.f32 %v688, %v829
    %v831 = vpop.f32.mrf.mxu0
    %832 = vdwg.mxu0
    %v833 = vadd.f32 %v830, %v624
    %s834 = scalar_lea.vmem [#allocation5], 384
    %v835 = vld [vmem:[%s834] sm:$0xf]
    %v836 = vld [vmem:[%s834 + $0x4] sm:$0xf]
    %v837 = vld [vmem:[%s834 + $0x8] sm:$0xf]
    %v838 = vld [vmem:[%s834 + $0xc] sm:$0xf]
    %v839 = vld [vmem:[%s834 + $0x10] sm:$0xf]
    %v840 = vld [vmem:[%s834 + $0x14] sm:$0xf]
    %v841 = vld [vmem:[%s834 + $0x18] sm:$0xf]
    %v842 = vld [vmem:[%s834 + $0x1c] sm:$0xf]
    %v843 = vld [vmem:[%s834 + $0x20] sm:$0xf]
    %v844 = vld [vmem:[%s834 + $0x24] sm:$0xf]
    %v845 = vld [vmem:[%s834 + $0x28] sm:$0xf]
    %v846 = vld [vmem:[%s834 + $0x2c] sm:$0xf]
    %v847 = vld [vmem:[%s834 + $0x30] sm:$0xf]
    %v848 = vld [vmem:[%s834 + $0x34] sm:$0xf]
    %v849 = vld [vmem:[%s834 + $0x38] sm:$0xf]
    %v850 = vld [vmem:[%s834 + $0x3c] sm:$0xf]
    %v851 = vld [vmem:[#allocation7 + $0x7] ss:$0 sm:$0xff]
    %v852 = vpack.c.bf16 %v833, %v833
    %v869 = vunpack.c.l.b16 %v835
    %v870 = vunpack.c.l.b16 %v836
    %v871 = vunpack.c.l.b16 %v837
    %v872 = vunpack.c.l.b16 %v838
    %v873 = vunpack.c.l.b16 %v839
    %v874 = vunpack.c.l.b16 %v840
    %v875 = vunpack.c.l.b16 %v841
    %v876 = vunpack.c.l.b16 %v842
    %v877 = vunpack.c.l.b16 %v843
    %v878 = vunpack.c.l.b16 %v844
    %v879 = vunpack.c.l.b16 %v845
    %v880 = vunpack.c.l.b16 %v846
    %v881 = vunpack.c.l.b16 %v847
    %v882 = vunpack.c.l.b16 %v848
    %v883 = vunpack.c.l.b16 %v849
    %v884 = vunpack.c.l.b16 %v850
    %v885 = vpack.c.b16 %v870, %v869
    %v886 = vpack.c.b16 %v872, %v871
    %v887 = vpack.c.b16 %v874, %v873
    %v888 = vpack.c.b16 %v876, %v875
    %v889 = vpack.c.b16 %v878, %v877
    %v890 = vpack.c.b16 %v880, %v879
    %v891 = vpack.c.b16 %v882, %v881
    %v892 = vpack.c.b16 %v884, %v883
    %901 = vmatpush.bf16.msra.mxu0 %v892
    %902 = vmatpush.bf16.msra.mxu0 %v891
    %903 = vmatpush.bf16.msra.mxu0 %v890
    %904 = vmatpush.bf16.msra.mxu0 %v889
    %905 = vmatpush.bf16.msra.mxu0 %v888
    %906 = vmatpush.bf16.msra.mxu0 %v887
    %907 = vmatpush.bf16.msra.mxu0 %v886
    %908 = vmatpush.bf16.msra.mxu0 %v885
    %909 = vmatmul.bf16.gmra.mxu0 %v852
    %v910 = vpop.f32.mrf.mxu0
    %v911 = vadd.f32 %v851, %v910
    %v912 = vpop.f32.mrf.mxu0
    %913 = vdwg.mxu0
    %914 = vst [vmem:[#allocation8] sm:$0xff] %v911
    // Predicated region
    $region38: #{denoising_mlp.1} parent=1 // pred_check
      _
    $region39: #{denoising_mlp.1} parent=1 // pred_check_branch
      %916 = sbr.rel (0) target = $region41
    $region40: #{denoising_mlp.1} parent=1 // pred_region
      %918 = vsyncadd [#allocation4], 0
      %s920 = sshll.u32 [#allocation8], 4
      %s921 = int_to_ptr.vmem [resolvable:$true] %s920
      %s922 = sshll.u32 %s6, 4
      %s923 = int_to_ptr.hbm [resolvable:$true] %s922
      %925 = dma.vmem_to_hbm [thread:$0]  %s921, 128, %s923, [#allocation4]
    $region41: #{denoising_mlp.1} parent=1 // pred_fallthru
      _
    // Predicated region
    $region42: #{denoising_mlp.1} parent=1 // pred_check
      _
    $region43: #{denoising_mlp.1} parent=1 // pred_check_branch
      %927 = sbr.rel (0) target = $region45
    $region44: #{denoising_mlp.1} parent=1 // pred_region
      %929 = dma.done [#allocation4], 128
    $region45: #{denoising_mlp.1} parent=1 // pred_fallthru
      _
    %930 = vsyncpa [#allocation3], 1
    %931 = vsyncpa [#allocation6], 1
    %932 = vsyncpa [#allocation4], 1

</llo_original>
